<compile_context>
chip_gen: v7x
topology: tpu7x:2x2x1
jax: 0.10.0
libtpu: 0.0.40
codegen_flags: <defaults>
</compile_context>

<pallas_src>
import jax
import jax.numpy as jnp
from jax.experimental import pallas as pl
from jax.experimental.pallas import tpu as pltpu


def _round_up(x, m):
    return ((x + m - 1) // m) * m


def gated_dense_kernel(x_ref, wh_ref, wg_ref, bh_ref, bg_ref, o_ref,
                       acc_h, acc_g):
    """One (tm, tn) output tile; grid axis 2 is the K reduction.

    x_ref  : (tm, tk)  bf16
    wh_ref : (tk, tn)  bf16   h-branch weight tile
    wg_ref : (tk, tn)  bf16   g-branch weight tile
    bh_ref : (1, tn)   f32
    bg_ref : (1, tn)   f32
    o_ref  : (tm, tn)  output dtype
    acc_h  : (tm, tn)  f32 VMEM accumulator (resident across K)
    acc_g  : (tm, tn)  f32 VMEM accumulator (resident across K)
    """
    k = pl.program_id(2)

    @pl.when(k == 0)
    def _():
        # Init accumulators with the broadcast bias: removes a separate
        # (tm, tn) f32 add from the epilogue.
        acc_h[...] = jnp.broadcast_to(bh_ref[...], acc_h.shape)
        acc_g[...] = jnp.broadcast_to(bg_ref[...], acc_g.shape)

    x = x_ref[...]
    acc_h[...] += jnp.dot(x, wh_ref[...], preferred_element_type=jnp.float32)
    acc_g[...] += jnp.dot(x, wg_ref[...], preferred_element_type=jnp.float32)

    # Epilogue only once, after the last K step.
    @pl.when(k == pl.num_programs(2) - 1)
    def _():
        h = jnp.maximum(acc_h[...], 0.0)     # relu branch (VPU)
        g = jax.nn.sigmoid(acc_g[...])       # sigmoid branch (exp -> EUP)
        o_ref[...] = (h * g).astype(o_ref.dtype)


def gated_dense(x, wh, bh, wg, bg, *, tm=None, tn=None, tk=None):
    """x: (..., K); wh, wg: (K, N); bh, bg: (1, N) -> (..., N)."""
    *lead, K = x.shape
    N = wh.shape[1]
    x2 = x.reshape(-1, K)
    M = x2.shape[0]

    # Tile sizes: lane dims multiples of 128, sublane multiples of 8, capped so
    # small shapes stay a single grid step.
    tm = tm or min(256, _round_up(M, 8))
    tn = tn or min(256, _round_up(N, 128))
    tk = tk or min(512, _round_up(K, 128))

    Mp, Np, Kp = _round_up(M, tm), _round_up(N, tn), _round_up(K, tk)

    def pad2(a, r, c):
        if r == a.shape[0] and c == a.shape[1]:
            return a
        return jnp.pad(a, ((0, r - a.shape[0]), (0, c - a.shape[1])))

    # Zero-pad to tile multiples (padded K rows contribute 0 to the dots;
    # padded N columns are sliced off at the end).
    xp = pad2(x2, Mp, Kp)
    whp = pad2(wh, Kp, Np)
    wgp = pad2(wg, Kp, Np)
    bhp = pad2(bh, 1, Np).astype(jnp.float32)
    bgp = pad2(bg, 1, Np).astype(jnp.float32)

    # bf16 inputs for the MXU; accumulation stays f32.
    x_bf = xp.astype(jnp.bfloat16)
    wh_bf = whp.astype(jnp.bfloat16)
    wg_bf = wgp.astype(jnp.bfloat16)

    grid = (Mp // tm, Np // tn, Kp // tk)

    out = pl.pallas_call(
        gated_dense_kernel,
        out_shape=jax.ShapeDtypeStruct((Mp, Np), x.dtype),
        grid_spec=pltpu.PrefetchScalarGridSpec(
            num_scalar_prefetch=0,
            grid=grid,
            in_specs=[
                pl.BlockSpec((tm, tk), lambda i, j, k: (i, k)),   # x tile
                pl.BlockSpec((tk, tn), lambda i, j, k: (k, j)),   # Wh tile
                pl.BlockSpec((tk, tn), lambda i, j, k: (k, j)),   # Wg tile
                pl.BlockSpec((1, tn), lambda i, j, k: (0, j)),    # bh (K-invariant)
                pl.BlockSpec((1, tn), lambda i, j, k: (0, j)),    # bg (K-invariant)
            ],
            out_specs=pl.BlockSpec((tm, tn), lambda i, j, k: (i, j)),
            scratch_shapes=[
                pltpu.VMEM((tm, tn), jnp.float32),   # acc_h
                pltpu.VMEM((tm, tn), jnp.float32),   # acc_g
            ],
        ),
        compiler_params=pltpu.CompilerParams(
            dimension_semantics=("parallel", "parallel", "arbitrary"),
            vmem_limit_bytes=32 * 1024 * 1024,
        ),
    )(x_bf, wh_bf, wg_bf, bhp, bgp)

    return out[:M, :N].reshape(*lead, N)


def reference(x, wh, bh, wg, bg, dot_dtype=jnp.float32):
    xd, whd, wgd = (a.astype(dot_dtype) for a in (x, wh, wg))
    h = jnp.maximum(jnp.dot(xd, whd, preferred_element_type=jnp.float32) + bh, 0.0)
    g = jax.nn.sigmoid(jnp.dot(xd, wgd, preferred_element_type=jnp.float32) + bg)
    return h * g


if __name__ == "__main__":
    # Shapes consistent with the module's forward: x (batch, input_size).
    batch, input_size, output_size = 8, 32, 64

    key = jax.random.PRNGKey(0)
    kx, kwh, kbh, kwg, kbg = jax.random.split(key, 5)

    x = jax.random.normal(kx, (batch, input_size), dtype=jnp.float32)

    # Deterministic init mimicking nn.Linear's U(-1/sqrt(in), 1/sqrt(in)).
    bound = 1.0 / (input_size ** 0.5)
    wh = jax.random.uniform(kwh, (input_size, output_size), jnp.float32, -bound, bound)
    bh = jax.random.uniform(kbh, (1, output_size), jnp.float32, -bound, bound)
    wg = jax.random.uniform(kwg, (input_size, output_size), jnp.float32, -bound, bound)
    bg = jax.random.uniform(kbg, (1, output_size), jnp.float32, -bound, bound)

    out = jax.jit(gated_dense)(x, wh, bh, wg, bg)
    jax.block_until_ready(out)

    assert out.shape == (batch, output_size)
    # Tight check against a bf16-input / f32-accumulation reference (same cast as kernel).
    ref_bf16 = reference(x, wh, bh, wg, bg, dot_dtype=jnp.bfloat16)
    assert jnp.allclose(out, ref_bf16, atol=1e-3, rtol=1e-3), \
        float(jnp.max(jnp.abs(out - ref_bf16)))
    # Loose semantic check against the full-f32 reference (bf16 matmul rounding).
    ref_f32 = reference(x, wh, bh, wg, bg)
    assert jnp.allclose(out, ref_f32, atol=6e-2, rtol=6e-2), \
        float(jnp.max(jnp.abs(out - ref_f32)))

    print("KERNEL_OK")
</pallas_src>

<mosaic_0001>
module attributes {stable_mosaic.version = 11 : i64} {
  func.func @gated_dense_kernel(%arg0: i32, %arg1: i32, %arg2: i32, %arg3: memref<8x128xbf16, #tpu.memory_space<vmem>>, %arg4: memref<128x128xbf16, #tpu.memory_space<vmem>>, %arg5: memref<128x128xbf16, #tpu.memory_space<vmem>>, %arg6: memref<1x128xf32, #tpu.memory_space<vmem>>, %arg7: memref<1x128xf32, #tpu.memory_space<vmem>>, %arg8: memref<8x128xf32, #tpu.memory_space<vmem>>, %arg9: memref<8x128xf32, #tpu.memory_space<vmem>>, %arg10: memref<8x128xf32, #tpu.memory_space<vmem>>) attributes {dimension_semantics = [#tpu.dimension_semantics<parallel>, #tpu.dimension_semantics<parallel>, #tpu.dimension_semantics<arbitrary>], iteration_bounds = array<i64: 1, 1, 1>, scalar_prefetch = 0 : i64, scratch_operands = 2 : i64, tpu.core_type = #tpu.core_type<tc>, window_params = [{transform_indices = @transform_0, window_bounds = array<i64: 8, 128>}, {transform_indices = @transform_1, window_bounds = array<i64: 128, 128>}, {transform_indices = @transform_2, window_bounds = array<i64: 128, 128>}, {transform_indices = @transform_3, window_bounds = array<i64: 1, 128>}, {transform_indices = @transform_4, window_bounds = array<i64: 1, 128>}, {transform_indices = @transform_5, window_bounds = array<i64: 8, 128>}]} {
    %c0_i32 = arith.constant 0 : i32
    %0 = arith.cmpi eq, %arg2, %c0_i32 : i32
    %1 = arith.extui %0 : i1 to i32
    %c0_i32_0 = arith.constant 0 : i32
    %2 = arith.cmpi ne, %1, %c0_i32_0 : i32
    scf.if %2 {
      %c0_17 = arith.constant 0 : index
      %c0_18 = arith.constant 0 : index
      %17 = vector.load %arg6[%c0_17, %c0_18] : memref<1x128xf32, #tpu.memory_space<vmem>>, vector<1x128xf32>
      %18 = vector.shape_cast %17 : vector<1x128xf32> to vector<1x128xf32>
      %19 = vector.broadcast %18 : vector<1x128xf32> to vector<8x128xf32>
      %c0_19 = arith.constant 0 : index
      %c0_20 = arith.constant 0 : index
      %20 = vector.load %arg9[%c0_19, %c0_20] : memref<8x128xf32, #tpu.memory_space<vmem>>, vector<8x128xf32>
      tpu.vector_store %arg9[%c0_19, %c0_20], %19 {strides = array<i32>} : memref<8x128xf32, #tpu.memory_space<vmem>>, vector<8x128xf32>,
      %c0_21 = arith.constant 0 : index
      %c0_22 = arith.constant 0 : index
      %21 = vector.load %arg7[%c0_21, %c0_22] : memref<1x128xf32, #tpu.memory_space<vmem>>, vector<1x128xf32>
      %22 = vector.shape_cast %21 : vector<1x128xf32> to vector<1x128xf32>
      %23 = vector.broadcast %22 : vector<1x128xf32> to vector<8x128xf32>
      %c0_23 = arith.constant 0 : index
      %c0_24 = arith.constant 0 : index
      %24 = vector.load %arg10[%c0_23, %c0_24] : memref<8x128xf32, #tpu.memory_space<vmem>>, vector<8x128xf32>
      tpu.vector_store %arg10[%c0_23, %c0_24], %23 {strides = array<i32>} : memref<8x128xf32, #tpu.memory_space<vmem>>, vector<8x128xf32>,
    } else {
    }
    %c0 = arith.constant 0 : index
    %c0_1 = arith.constant 0 : index
    %3 = vector.load %arg3[%c0, %c0_1] : memref<8x128xbf16, #tpu.memory_space<vmem>>, vector<8x128xbf16>
    %c0_2 = arith.constant 0 : index
    %c0_3 = arith.constant 0 : index
    %4 = vector.load %arg9[%c0_2, %c0_3] : memref<8x128xf32, #tpu.memory_space<vmem>>, vector<8x128xf32>
    %c0_4 = arith.constant 0 : index
    %c0_5 = arith.constant 0 : index
    %5 = vector.load %arg4[%c0_4, %c0_5] : memref<128x128xbf16, #tpu.memory_space<vmem>>, vector<128x128xbf16>
    %cst = arith.constant dense<0.000000e+00> : vector<8x128xf32>
    %6 = tpu.matmul %3, %5, %cst {dimension_numbers = #tpu.dot_dimension_numbers<[1], [0], [0], [1], [0, 0, 1, 1], [], []>} : vector<8x128xbf16>, vector<128x128xbf16>, vector<8x128xf32> -> vector<8x128xf32>
    %7 = arith.addf %4, %6 : vector<8x128xf32>
    %c0_6 = arith.constant 0 : index
    %c0_7 = arith.constant 0 : index
    %8 = vector.load %arg9[%c0_6, %c0_7] : memref<8x128xf32, #tpu.memory_space<vmem>>, vector<8x128xf32>
    tpu.vector_store %arg9[%c0_6, %c0_7], %7 {strides = array<i32>} : memref<8x128xf32, #tpu.memory_space<vmem>>, vector<8x128xf32>,
    %c0_8 = arith.constant 0 : index
    %c0_9 = arith.constant 0 : index
    %9 = vector.load %arg10[%c0_8, %c0_9] : memref<8x128xf32, #tpu.memory_space<vmem>>, vector<8x128xf32>
    %c0_10 = arith.constant 0 : index
    %c0_11 = arith.constant 0 : index
    %10 = vector.load %arg5[%c0_10, %c0_11] : memref<128x128xbf16, #tpu.memory_space<vmem>>, vector<128x128xbf16>
    %cst_12 = arith.constant dense<0.000000e+00> : vector<8x128xf32>
    %11 = tpu.matmul %3, %10, %cst_12 {dimension_numbers = #tpu.dot_dimension_numbers<[1], [0], [0], [1], [0, 0, 1, 1], [], []>} : vector<8x128xbf16>, vector<128x128xbf16>, vector<8x128xf32> -> vector<8x128xf32>
    %12 = arith.addf %9, %11 : vector<8x128xf32>
    %c0_13 = arith.constant 0 : index
    %c0_14 = arith.constant 0 : index
    %13 = vector.load %arg10[%c0_13, %c0_14] : memref<8x128xf32, #tpu.memory_space<vmem>>, vector<8x128xf32>
    tpu.vector_store %arg10[%c0_13, %c0_14], %12 {strides = array<i32>} : memref<8x128xf32, #tpu.memory_space<vmem>>, vector<8x128xf32>,
    %c0_i32_15 = arith.constant 0 : i32
    %14 = arith.cmpi eq, %arg2, %c0_i32_15 : i32
    %15 = arith.extui %14 : i1 to i32
    %c0_i32_16 = arith.constant 0 : i32
    %16 = arith.cmpi ne, %15, %c0_i32_16 : i32
    scf.if %16 {
      %c0_17 = arith.constant 0 : index
      %c0_18 = arith.constant 0 : index
      %17 = vector.load %arg9[%c0_17, %c0_18] : memref<8x128xf32, #tpu.memory_space<vmem>>, vector<8x128xf32>
      %cst_19 = arith.constant 0.000000e+00 : f32
      %18 = vector.broadcast %cst_19 : f32 to vector<8x128xf32>
      %19 = arith.maximumf %17, %18 : vector<8x128xf32>
      %c0_20 = arith.constant 0 : index
      %c0_21 = arith.constant 0 : index
      %20 = vector.load %arg10[%c0_20, %c0_21] : memref<8x128xf32, #tpu.memory_space<vmem>>, vector<8x128xf32>
      %21 = arith.negf %20 : vector<8x128xf32>
      %22 = math.exp %21 : vector<8x128xf32>
      %cst_22 = arith.constant 1.000000e+00 : f32
      %23 = vector.broadcast %cst_22 : f32 to vector<8x128xf32>
      %24 = arith.addf %23, %22 : vector<8x128xf32>
      %25 = arith.divf %23, %24 : vector<8x128xf32>
      %26 = arith.mulf %19, %25 : vector<8x128xf32>
      %c0_23 = arith.constant 0 : index
      %c0_24 = arith.constant 0 : index
      %27 = vector.load %arg8[%c0_23, %c0_24] : memref<8x128xf32, #tpu.memory_space<vmem>>, vector<8x128xf32>
      tpu.vector_store %arg8[%c0_23, %c0_24], %26 {strides = array<i32>} : memref<8x128xf32, #tpu.memory_space<vmem>>, vector<8x128xf32>,
    } else {
    }
    return
  }
  func.func @transform_0(%arg0: i32, %arg1: i32, %arg2: i32) -> (i32, i32) {
    %c0_i32 = arith.constant 0 : i32
    return %arg0, %arg2 : i32, i32
  }
  func.func @transform_1(%arg0: i32, %arg1: i32, %arg2: i32) -> (i32, i32) {
    %c0_i32 = arith.constant 0 : i32
    return %arg2, %arg1 : i32, i32
  }
  func.func @transform_2(%arg0: i32, %arg1: i32, %arg2: i32) -> (i32, i32) {
    %c0_i32 = arith.constant 0 : i32
    return %arg2, %arg1 : i32, i32
  }
  func.func @transform_3(%arg0: i32, %arg1: i32, %arg2: i32) -> (i32, i32) {
    %c0_i32 = arith.constant 0 : i32
    %c0_i32_0 = arith.constant 0 : i32
    return %c0_i32, %arg1 : i32, i32
  }
  func.func @transform_4(%arg0: i32, %arg1: i32, %arg2: i32) -> (i32, i32) {
    %c0_i32 = arith.constant 0 : i32
    %c0_i32_0 = arith.constant 0 : i32
    return %c0_i32, %arg1 : i32, i32
  }
  func.func @transform_5(%arg0: i32, %arg1: i32, %arg2: i32) -> (i32, i32) {
    %c0_i32 = arith.constant 0 : i32
    return %arg0, %arg1 : i32, i32
  }
}

</mosaic_0001>

<llo_original>
// kernel: gated_dense.1
$region0: #{gated_dense.1}
  #allocation0 [shape = 'u32[]', space=smem, size = 0x4, offset = 0x4, fixed_abs, tag = 'smem constant byte address 0x4 - core index']
  #allocation1 [shape = 'u32[144,128]{1,0:T(1,128)}', space=vmem, size = 0x12000, scoped, tag = 'internal scratch']
  #allocation2 [shape = 'f32[8,128]{1,0:T(8,128)}', space=vmem, size = 0x1000, scoped, tag = 'scratch operand']
  #allocation3 [shape = 'f32[8,128]{1,0:T(8,128)}', space=vmem, size = 0x1000, scoped, tag = 'scratch operand']
  %s0 = inlined_call_operand.vmem [shape: bf16[8,128], index: 0, kind: input, shape index: {}]
  %s1 = inlined_call_operand.vmem [shape: bf16[128,128], index: 1, kind: input, shape index: {}]
  %s2 = inlined_call_operand.vmem [shape: bf16[128,128], index: 2, kind: input, shape index: {}]
  %s3 = inlined_call_operand.vmem [shape: f32[1,128], index: 3, kind: input, shape index: {}]
  %s4 = inlined_call_operand.vmem [shape: f32[1,128], index: 4, kind: input, shape index: {}]
  %s5 = inlined_call_operand.hbm [shape: f32[8,128], index: 5, kind: output, shape index: {}]
  %s6 = sld [smem:[#allocation0]]
  $region38: #{gated_dense.1} parent=0
    _
  %s8 = ssub.s32 1, %s6
  %s9 = scalar_select 0, %s8, %s6
  $region1: #{gated_dense.1} parent=0
    #allocation4 [shape = 'u8[4096]{0}', space=vmem, size = 0x1000, scoped, tag = 'output window, operand 0, single buffered']
    #allocation5 [shape = 's32[1]{0}', space=sflag, size = 0x4, scoped, tag = 'scoped memory for gated_dense.1']
    %10 = vsyncpa [#allocation5], 0
    // Predicated region
    $region2: #{gated_dense.1} parent=1 // pred_check
      _
    $region3: #{gated_dense.1} parent=1 // pred_check_branch
      %12 = sbr.rel (0) target = $region5
    $region4: #{gated_dense.1} parent=1 // pred_region
      _
    $region5: #{gated_dense.1} parent=1 // pred_fallthru
      _
    // Predicated region
    $region6: #{gated_dense.1} parent=1 // pred_check
      _
    $region7: #{gated_dense.1} parent=1 // pred_check_branch
      %14 = sbr.rel (0) target = $region9
    $region8: #{gated_dense.1} parent=1 // pred_region
      _
    $region9: #{gated_dense.1} parent=1 // pred_fallthru
      _
    // Predicated region
    $region10: #{gated_dense.1} parent=1 // pred_check
      _
    $region11: #{gated_dense.1} parent=1 // pred_check_branch
      %16 = sbr.rel (0) target = $region13
    $region12: #{gated_dense.1} parent=1 // pred_region
      _
    $region13: #{gated_dense.1} parent=1 // pred_fallthru
      _
    // Predicated region
    $region14: #{gated_dense.1} parent=1 // pred_check
      _
    $region15: #{gated_dense.1} parent=1 // pred_check_branch
      %18 = sbr.rel (0) target = $region17
    $region16: #{gated_dense.1} parent=1 // pred_region
      _
    $region17: #{gated_dense.1} parent=1 // pred_fallthru
      _
    // Predicated region
    $region18: #{gated_dense.1} parent=1 // pred_check
      _
    $region19: #{gated_dense.1} parent=1 // pred_check_branch
      %20 = sbr.rel (0) target = $region21
    $region20: #{gated_dense.1} parent=1 // pred_region
      _
    $region21: #{gated_dense.1} parent=1 // pred_fallthru
      _
    %p22 = scmp.eq.s32.totalorder 0, 0
    // Predicated region
    $region22: #{gated_dense.1} parent=1 // pred_check
      %p23 = pneg %p22
    $region23: #{gated_dense.1} parent=1 // pred_check_branch
      %25 = sbr.rel (%p23) target = $region25
    $region24: #{gated_dense.1} parent=1 // pred_region
      %v26 = vld [vmem:[%s3] sm:$0x1]
      %v28 = vlaneseq
      %v29 = vshrl.u32 %v28, 7
      %v30 = vsub.s32 0, %v29
      %v31 = vrot.slane %v26, %v30
      %33 = vst [vmem:[#allocation2] sm:$0xff] %v31
      %v34 = vld [vmem:[%s4] sm:$0x1]
      %v36 = vlaneseq
      %v37 = vshrl.u32 %v36, 7
      %v38 = vsub.s32 0, %v37
      %v39 = vrot.slane %v34, %v38
      %41 = vst [vmem:[#allocation3] sm:$0xff] %v39
    $region25: #{gated_dense.1} parent=1 // pred_fallthru
      _
    %v42 = vld [vmem:[%s0] sm:$0xf]
    %v43 = vld [vmem:[#allocation2] sm:$0xff]
    %v44 = vld [vmem:[%s1] sm:$0xf]
    %v45 = vld [vmem:[%s1 + $0x4] sm:$0xf]
    %v46 = vld [vmem:[%s1 + $0x8] sm:$0xf]
    %v47 = vld [vmem:[%s1 + $0xc] sm:$0xf]
    %v48 = vld [vmem:[%s1 + $0x10] sm:$0xf]
    %v49 = vld [vmem:[%s1 + $0x14] sm:$0xf]
    %v50 = vld [vmem:[%s1 + $0x18] sm:$0xf]
    %v51 = vld [vmem:[%s1 + $0x1c] sm:$0xf]
    %v52 = vld [vmem:[%s1 + $0x20] sm:$0xf]
    %v53 = vld [vmem:[%s1 + $0x24] sm:$0xf]
    %v54 = vld [vmem:[%s1 + $0x28] sm:$0xf]
    %v55 = vld [vmem:[%s1 + $0x2c] sm:$0xf]
    %v56 = vld [vmem:[%s1 + $0x30] sm:$0xf]
    %v57 = vld [vmem:[%s1 + $0x34] sm:$0xf]
    %v58 = vld [vmem:[%s1 + $0x38] sm:$0xf]
    %v59 = vld [vmem:[%s1 + $0x3c] sm:$0xf]
    %v76 = vunpack.c.l.b16 %v44
    %v77 = vunpack.c.l.b16 %v45
    %v78 = vunpack.c.l.b16 %v46
    %v79 = vunpack.c.l.b16 %v47
    %v80 = vunpack.c.l.b16 %v48
    %v81 = vunpack.c.l.b16 %v49
    %v82 = vunpack.c.l.b16 %v50
    %v83 = vunpack.c.l.b16 %v51
    %v84 = vunpack.c.l.b16 %v52
    %v85 = vunpack.c.l.b16 %v53
    %v86 = vunpack.c.l.b16 %v54
    %v87 = vunpack.c.l.b16 %v55
    %v88 = vunpack.c.l.b16 %v56
    %v89 = vunpack.c.l.b16 %v57
    %v90 = vunpack.c.l.b16 %v58
    %v91 = vunpack.c.l.b16 %v59
    %v92 = vpack.c.b16 %v77, %v76
    %v93 = vpack.c.b16 %v79, %v78
    %v94 = vpack.c.b16 %v81, %v80
    %v95 = vpack.c.b16 %v83, %v82
    %v96 = vpack.c.b16 %v85, %v84
    %v97 = vpack.c.b16 %v87, %v86
    %v98 = vpack.c.b16 %v89, %v88
    %v99 = vpack.c.b16 %v91, %v90
    %108 = vmatprep.subr.bf16.mxu0 0
    %109 = vmatpush1.bf16.msra.mxu0 %v92
    %110 = vmatprep.subr.bf16.mxu0 0
    %111 = vmatpush1.bf16.msra.mxu0 %v93
    %112 = vmatprep.subr.bf16.mxu0 0
    %113 = vmatpush1.bf16.msra.mxu0 %v94
    %114 = vmatprep.subr.bf16.mxu0 0
    %115 = vmatpush1.bf16.msra.mxu0 %v95
    %116 = vmatprep.subr.bf16.mxu0 0
    %117 = vmatpush1.bf16.msra.mxu0 %v96
    %118 = vmatprep.subr.bf16.mxu0 0
    %119 = vmatpush1.bf16.msra.mxu0 %v97
    %120 = vmatprep.subr.bf16.mxu0 0
    %121 = vmatpush1.bf16.msra.mxu0 %v98
    %122 = vmatprep.subr.bf16.mxu0 0
    %123 = vmatpush1.bf16.msra.mxu0 %v99
    %124 = vmatprep.subr.bf16.mxu0 0
    %125 = vmatpush1.bf16.msra.mxu0 0
    %126 = vmatprep.subr.bf16.mxu0 0
    %127 = vmatpush1.bf16.msra.mxu0 0
    %128 = vmatprep.subr.bf16.mxu0 0
    %129 = vmatpush1.bf16.msra.mxu0 0
    %130 = vmatprep.subr.bf16.mxu0 0
    %131 = vmatpush1.bf16.msra.mxu0 0
    %132 = vmatprep.subr.bf16.mxu0 0
    %133 = vmatpush1.bf16.msra.mxu0 0
    %134 = vmatprep.subr.bf16.mxu0 0
    %135 = vmatpush1.bf16.msra.mxu0 0
    %136 = vmatprep.subr.bf16.mxu0 0
    %137 = vmatpush1.bf16.msra.mxu0 0
    %138 = vmatprep.subr.bf16.mxu0 0
    %139 = vmatpush1.bf16.msra.mxu0 0
    %140 = vmatprep.mubr.bf16.mxu0 0
    %141 = vmatmul.mubr.bf16.gmra.mrb[0].mxu0 %v42
    %v142 = vpop.f32.mrb[0].mxu0
    %v143 = vadd.f32 0.0, %v142
    %v144 = vpop.f32.mrb[0].mxu0
    %v145 = vpop.f32.mrb[0].mxu0
    %v146 = vpop.f32.mrb[0].mxu0
    %147 = vdwg.mxu0
    %v148 = vadd.f32 %v43, %v143
    %149 = vst [vmem:[#allocation2] sm:$0xff] %v148
    %v150 = vld [vmem:[#allocation3] sm:$0xff]
    %v151 = vld [vmem:[%s2] sm:$0xf]
    %v152 = vld [vmem:[%s2 + $0x4] sm:$0xf]
    %v153 = vld [vmem:[%s2 + $0x8] sm:$0xf]
    %v154 = vld [vmem:[%s2 + $0xc] sm:$0xf]
    %v155 = vld [vmem:[%s2 + $0x10] sm:$0xf]
    %v156 = vld [vmem:[%s2 + $0x14] sm:$0xf]
    %v157 = vld [vmem:[%s2 + $0x18] sm:$0xf]
    %v158 = vld [vmem:[%s2 + $0x1c] sm:$0xf]
    %v159 = vld [vmem:[%s2 + $0x20] sm:$0xf]
    %v160 = vld [vmem:[%s2 + $0x24] sm:$0xf]
    %v161 = vld [vmem:[%s2 + $0x28] sm:$0xf]
    %v162 = vld [vmem:[%s2 + $0x2c] sm:$0xf]
    %v163 = vld [vmem:[%s2 + $0x30] sm:$0xf]
    %v164 = vld [vmem:[%s2 + $0x34] sm:$0xf]
    %v165 = vld [vmem:[%s2 + $0x38] sm:$0xf]
    %v166 = vld [vmem:[%s2 + $0x3c] sm:$0xf]
    %v183 = vunpack.c.l.b16 %v151
    %v184 = vunpack.c.l.b16 %v152
    %v185 = vunpack.c.l.b16 %v153
    %v186 = vunpack.c.l.b16 %v154
    %v187 = vunpack.c.l.b16 %v155
    %v188 = vunpack.c.l.b16 %v156
    %v189 = vunpack.c.l.b16 %v157
    %v190 = vunpack.c.l.b16 %v158
    %v191 = vunpack.c.l.b16 %v159
    %v192 = vunpack.c.l.b16 %v160
    %v193 = vunpack.c.l.b16 %v161
    %v194 = vunpack.c.l.b16 %v162
    %v195 = vunpack.c.l.b16 %v163
    %v196 = vunpack.c.l.b16 %v164
    %v197 = vunpack.c.l.b16 %v165
    %v198 = vunpack.c.l.b16 %v166
    %v199 = vpack.c.b16 %v184, %v183
    %v200 = vpack.c.b16 %v186, %v185
    %v201 = vpack.c.b16 %v188, %v187
    %v202 = vpack.c.b16 %v190, %v189
    %v203 = vpack.c.b16 %v192, %v191
    %v204 = vpack.c.b16 %v194, %v193
    %v205 = vpack.c.b16 %v196, %v195
    %v206 = vpack.c.b16 %v198, %v197
    %215 = vmatprep.subr.bf16.mxu0 0
    %216 = vmatpush1.bf16.msra.mxu0 %v199
    %217 = vmatprep.subr.bf16.mxu0 0
    %218 = vmatpush1.bf16.msra.mxu0 %v200
    %219 = vmatprep.subr.bf16.mxu0 0
    %220 = vmatpush1.bf16.msra.mxu0 %v201
    %221 = vmatprep.subr.bf16.mxu0 0
    %222 = vmatpush1.bf16.msra.mxu0 %v202
    %223 = vmatprep.subr.bf16.mxu0 0
    %224 = vmatpush1.bf16.msra.mxu0 %v203
    %225 = vmatprep.subr.bf16.mxu0 0
    %226 = vmatpush1.bf16.msra.mxu0 %v204
    %227 = vmatprep.subr.bf16.mxu0 0
    %228 = vmatpush1.bf16.msra.mxu0 %v205
    %229 = vmatprep.subr.bf16.mxu0 0
    %230 = vmatpush1.bf16.msra.mxu0 %v206
    %231 = vmatprep.subr.bf16.mxu0 0
    %232 = vmatpush1.bf16.msra.mxu0 0
    %233 = vmatprep.subr.bf16.mxu0 0
    %234 = vmatpush1.bf16.msra.mxu0 0
    %235 = vmatprep.subr.bf16.mxu0 0
    %236 = vmatpush1.bf16.msra.mxu0 0
    %237 = vmatprep.subr.bf16.mxu0 0
    %238 = vmatpush1.bf16.msra.mxu0 0
    %239 = vmatprep.subr.bf16.mxu0 0
    %240 = vmatpush1.bf16.msra.mxu0 0
    %241 = vmatprep.subr.bf16.mxu0 0
    %242 = vmatpush1.bf16.msra.mxu0 0
    %243 = vmatprep.subr.bf16.mxu0 0
    %244 = vmatpush1.bf16.msra.mxu0 0
    %245 = vmatprep.subr.bf16.mxu0 0
    %246 = vmatpush1.bf16.msra.mxu0 0
    %247 = vmatprep.mubr.bf16.mxu0 0
    %248 = vmatmul.mubr.bf16.gmra.mrb[0].mxu0 %v42
    %v249 = vpop.f32.mrb[0].mxu0
    %v250 = vadd.f32 0.0, %v249
    %v251 = vpop.f32.mrb[0].mxu0
    %v252 = vpop.f32.mrb[0].mxu0
    %v253 = vpop.f32.mrb[0].mxu0
    %254 = vdwg.mxu0
    %v255 = vadd.f32 %v150, %v250
    %256 = vst [vmem:[#allocation3] sm:$0xff] %v255
    // Predicated region
    $region26: #{gated_dense.1} parent=1 // pred_check
      %p257 = pneg %p22
    $region27: #{gated_dense.1} parent=1 // pred_check_branch
      %259 = sbr.rel (%p257) target = $region29
    $region28: #{gated_dense.1} parent=1 // pred_region
      %v260 = vld [vmem:[#allocation2] sm:$0xff]
      %v261 = vmax.f32 %v260, 0.0
      %v262 = vld [vmem:[#allocation3] sm:$0xff]
      %v263 = vxor.u32 %v262, 2147483648
      %v264 = vmul.f32 %v263, 1.442695
      %v265 = vpow.pop %v264
      %v266 = vadd.f32 %v265, 1.0
      %v267 = vrcp.pop %v266
      %v268 = vmul.f32 1.0, %v267
      %v269 = vmul.f32 %v261, %v268
      %270 = vst [vmem:[#allocation4] sm:$0xff] %v269
    $region29: #{gated_dense.1} parent=1 // pred_fallthru
      _
    // Predicated region
    $region30: #{gated_dense.1} parent=1 // pred_check
      _
    $region31: #{gated_dense.1} parent=1 // pred_check_branch
      %272 = sbr.rel (0) target = $region33
    $region32: #{gated_dense.1} parent=1 // pred_region
      %s274 = ssub.s32 128, 128
      %275 = vsyncadd [#allocation5], %s274
      %s277 = sshll.u32 [#allocation4], 4
      %s278 = int_to_ptr.vmem [resolvable:$true] %s277
      %280 = dma.vmem_to_hbm [thread:$0]  %s278, 128, %s5, [#allocation5]
    $region33: #{gated_dense.1} parent=1 // pred_fallthru
      _
    // Predicated region
    $region34: #{gated_dense.1} parent=1 // pred_check
      _
    $region35: #{gated_dense.1} parent=1 // pred_check_branch
      %282 = sbr.rel (0) target = $region37
    $region36: #{gated_dense.1} parent=1 // pred_region
      %283 = dma.done [#allocation5], 128
    $region37: #{gated_dense.1} parent=1 // pred_fallthru
      _
    %284 = vsyncpa [#allocation5], 1

</llo_original>
